<compile_context>
chip_gen: v6e
topology: v6e:2x2x1
jax: 0.10.0
libtpu: 0.0.40
codegen_flags: <defaults>
</compile_context>

<pallas_src>
import jax
import jax.numpy as jnp
from jax.experimental import pallas as pl
from jax.experimental.pallas import tpu as pltpu


_LANE = 128
# Minimum spatial tile (pixels) when more than one tile is needed: keeps the
# int8 label block's sublane extent a multiple of its (32, 128) native tile
# (and the f32 / bf16 logits blocks multiples of (8, 128) / (16, 128)).
_MIN_TILE = 32 * _LANE


def _vmem_limit_bytes():
    """Generation-aware scoped-VMEM limit (v7x has only 64 MiB per core)."""
    try:
        phys = int(pltpu.get_tpu_info().vmem_capacity_bytes)
    except Exception:
        phys = 64 << 20          # assume the tightest generation (v7x per-TC)
    return min(max(phys * 3 // 4, 16 << 20), 96 << 20)


def _choose_hw_tile(hw, c, itemsize, vmem_limit, hw_tile=None):
    """Pick the spatial tile THW (pixels).  Returns (thw, hw_pad, n_hw)."""
    hw_128 = -(-hw // _LANE) * _LANE
    if hw_tile is None:
        # Per-pixel VMEM footprint: 2x double-buffered native-dtype logits +
        # 2x int8 labels + ~4 tile-sized f32 temporaries in the kernel body.
        per_pixel = 2 * c * itemsize + 2 + 4 * c * 4
        thw = (vmem_limit * 7 // 10) // per_pixel
    else:
        thw = int(hw_tile)
    if thw >= hw_128:
        return hw_128, hw_128, 1                    # single full-extent tile
    thw = max(_MIN_TILE, (thw // _MIN_TILE) * _MIN_TILE)
    n_hw = -(-hw // thw)
    return thw, n_hw * thw, n_hw


def _miou_kernel(x_ref, lbl_ref, inter_ref, union_ref):
    """One spatial tile of one sample.

    x_ref:     (1, C, S, 128)  logits, native dtype (upcast to f32 in-kernel)
    lbl_ref:   (1, 1, S, 128)  int8/int32 class labels (padded pixels hold C)
    inter_ref: (1, 1, C, 128)  f32 per-class lane-dense partial sums
    union_ref: (1, 1, C, 128)  f32 per-class lane-dense partial sums
    """
    c = x_ref.shape[1]
    lbl = lbl_ref[0, 0].astype(jnp.int32)           # (S, 128)

    # Per-pixel softmax over the class axis.  Each class is a full (S, 128)
    # sublane+lane slab, so every reduction over C is an elementwise VALU op.
    xs = [x_ref[0, k].astype(jnp.float32) for k in range(c)]
    m = xs[0]
    for k in range(1, c):
        m = jnp.maximum(m, xs[k])
    es = [jnp.exp(v - m) for v in xs]
    den = es[0]
    for k in range(1, c):
        den = den + es[k]
    inv = pl.reciprocal(den, approx=True)           # EUP vrcp, ~2^-12 rel err

    for k in range(c):
        p = es[k] * inv                             # (S, 128) softmax prob
        t = lbl == k                                # (S, 128) one-hot mask
        # Hard one-hot identities: p*t = where(t, p, 0); p+t-p*t = where(t, 1, p)
        inter_row = jnp.sum(jnp.where(t, p, 0.0), axis=0, keepdims=True)
        union_row = jnp.sum(jnp.where(t, 1.0, p), axis=0, keepdims=True)
        inter_ref[0, 0, pl.ds(k, 1), :] = inter_row   # (1, 128) lane-dense
        union_ref[0, 0, pl.ds(k, 1), :] = union_row


def _miou_sums(x_ncl, labels_nl, hw_tile=None):
    """Per-sample, per-class (inter, union) sums via the Pallas kernel.

    x_ncl:     (N, C, HW) logits, native dtype (upcast happens in-kernel)
    labels_nl: (N, HW) integer class labels
    hw_tile:   optional explicit spatial tile (pixels)
    """
    N, C, HW = x_ncl.shape
    itemsize = jnp.dtype(x_ncl.dtype).itemsize
    vmem_limit = _vmem_limit_bytes()
    thw, hw_pad, n_hw = _choose_hw_tile(HW, C, itemsize, vmem_limit, hw_tile)

    lbl_dtype = jnp.int8 if C < 127 else jnp.int32
    if hw_pad != HW:
        # Pad with zero logits and an out-of-range label: padded pixels add
        # exactly 1/C per class to union and nothing to inter; that constant
        # is removed below, so the kernel needs no ragged-tile masking and
        # never sees non-finite data.
        x_ncl = jnp.pad(x_ncl, ((0, 0), (0, 0), (0, hw_pad - HW)))
        labels_nl = jnp.pad(labels_nl, ((0, 0), (0, hw_pad - HW)),
                            constant_values=C)

    n_rows = hw_pad // _LANE
    s_rows = thw // _LANE
    x4 = x_ncl.reshape(N, C, n_rows, _LANE)
    lbl4 = labels_nl.astype(lbl_dtype).reshape(N, 1, n_rows, _LANE)

    # TODO(synk): on v7x, sweep pipeline_mode=pl.Buffered(3) on the logits
    # BlockSpec if an xprof trace shows exposed input DMA.
    inter_p, union_p = pl.pallas_call(
        _miou_kernel,
        out_shape=(jax.ShapeDtypeStruct((N, n_hw, C, _LANE), jnp.float32),
                   jax.ShapeDtypeStruct((N, n_hw, C, _LANE), jnp.float32)),
        grid_spec=pltpu.PrefetchScalarGridSpec(
            num_scalar_prefetch=0,
            grid=(N, n_hw),
            in_specs=[
                pl.BlockSpec((1, C, s_rows, _LANE), lambda i, j: (i, 0, j, 0)),
                pl.BlockSpec((1, 1, s_rows, _LANE), lambda i, j: (i, 0, j, 0)),
            ],
            out_specs=[
                pl.BlockSpec((1, 1, C, _LANE), lambda i, j: (i, j, 0, 0)),
                pl.BlockSpec((1, 1, C, _LANE), lambda i, j: (i, j, 0, 0)),
            ],
        ),
        compiler_params=pltpu.CompilerParams(
            dimension_semantics=("parallel", "parallel"),
            vmem_limit_bytes=vmem_limit),
    )(x4, lbl4)

    # Tiny final reduction in plain JAX: over spatial tiles and lanes.
    inter = jnp.sum(inter_p, axis=(1, 3))           # (N, C)
    union = jnp.sum(union_p, axis=(1, 3))           # (N, C)
    if hw_pad != HW:
        union = union - (hw_pad - HW) / C           # exact padded contribution
    return inter, union


def miou_loss_from_labels(inputs, labels, n_classes=2, ignore_indix=None,
                          weight=None, hw_tile=None):
    """mIoU loss from NCHW logits and integer labels (N, H, W).

    Preferred API: avoids the dense one-hot target entirely (no argmax pass,
    half the HBM traffic of the one-hot path).
    """
    # Matches the PyTorch module: the ignore path always drops the LAST class
    # channel (the module slices channels [0, n_classes-1)).
    if ignore_indix is not None:
        classes = n_classes - 1
        inputs = inputs[:, :classes, :, :]
    else:
        classes = n_classes

    N, C, H, W = inputs.shape
    assert C == classes
    x = inputs.reshape(N, C, H * W)                 # native dtype, no wrapper cast
    lbl = labels.reshape(N, H * W)

    inter, union = _miou_sums(x, lbl, hw_tile=hw_tile)
    iou = inter / union                             # union > 0: softmax p > 0
    loss = 1.0 - jnp.mean(iou, axis=1)              # (N,)

    if weight is None:
        return jnp.mean(loss)
    w = jnp.squeeze(weight)
    return jnp.sum(loss * w)


def miou_loss(inputs, target_onehot, n_classes=2, ignore_indix=None,
              weight=None, hw_tile=None):
    """Module-equivalent API (NCHW logits + NCHW one-hot target).

    The dense one-hot target is converted to integer labels in the wrapper
    (exact when target_oneHot is a hard one-hot encoding, which is what the
    module expects); the kernel then streams only int8 labels.  Labels equal
    to an ignored (sliced-off) class never match a kept channel, reproducing
    the all-zero target rows of the PyTorch ignore path.  Training code should
    prefer miou_loss_from_labels and skip the argmax pass.
    """
    labels = jnp.argmax(target_onehot, axis=1).astype(jnp.int32)   # (N, H, W)
    return miou_loss_from_labels(inputs, labels, n_classes=n_classes,
                                 ignore_indix=ignore_indix, weight=weight,
                                 hw_tile=hw_tile)


def _reference_loss(inputs, target_onehot):
    # pure-JAX reference matching the PyTorch forward (weight=None path)
    N, C = inputs.shape[0], inputs.shape[1]
    p = jax.nn.softmax(inputs, axis=1)
    inter = p * target_onehot
    union = p + target_onehot - inter
    inter = inter.reshape(N, C, -1).sum(2)
    union = union.reshape(N, C, -1).sum(2)
    miou = (inter / union).mean(1)
    return (1.0 - miou).mean()


if __name__ == "__main__":
    key = jax.random.PRNGKey(0)
    k1, k2, k3, k4 = jax.random.split(key, 4)

    # Tolerance: the kernel uses the approximate EUP reciprocal (~2^-12
    # relative error) in the softmax divide, so compare at 2e-3 rather than
    # float32-exact.
    TOL = 2e-3

    # Case 1: canonical small shape (single full-extent spatial tile).
    N, C, H, W = 2, 4, 16, 16
    logits = jax.random.normal(k1, (N, C, H, W), dtype=jnp.float32)
    labels = jax.random.randint(k2, (N, H, W), 0, C)
    onehot = jnp.transpose(jax.nn.one_hot(labels, C, dtype=jnp.float32),
                           (0, 3, 1, 2))  # NCHW

    loss = jax.block_until_ready(miou_loss(logits, onehot, n_classes=C))
    ref = _reference_loss(logits, onehot)
    assert jnp.allclose(loss, ref, atol=TOL, rtol=TOL), (loss, ref)

    # Case 2: spatial extent not a multiple of the (forced) tile — exercises
    # the multi-tile grid and the pad-and-correct path (HW = 5184, tile 4096).
    H2, W2 = 72, 72
    logits2 = jax.random.normal(k3, (N, C, H2, W2), dtype=jnp.float32)
    labels2 = jax.random.randint(k4, (N, H2, W2), 0, C)
    onehot2 = jnp.transpose(jax.nn.one_hot(labels2, C, dtype=jnp.float32),
                            (0, 3, 1, 2))
    loss2 = jax.block_until_ready(
        miou_loss_from_labels(logits2, labels2, n_classes=C, hw_tile=4096))
    ref2 = _reference_loss(logits2, onehot2)
    assert jnp.allclose(loss2, ref2, atol=TOL, rtol=TOL), (loss2, ref2)

    print("KERNEL_OK")
</pallas_src>

<mosaic_0001>
module attributes {stable_mosaic.version = 11 : i64} {
  func.func @_miou_kernel(%arg0: i32, %arg1: i32, %arg2: memref<1x4x2x128xf32, #tpu.memory_space<vmem>>, %arg3: memref<1x1x2x128xi8, #tpu.memory_space<vmem>>, %arg4: memref<1x1x4x128xf32, #tpu.memory_space<vmem>>, %arg5: memref<1x1x4x128xf32, #tpu.memory_space<vmem>>) attributes {dimension_semantics = [#tpu.dimension_semantics<parallel>, #tpu.dimension_semantics<parallel>], iteration_bounds = array<i64: 2, 1>, scalar_prefetch = 0 : i64, scratch_operands = 0 : i64, tpu.core_type = #tpu.core_type<tc>, window_params = [{transform_indices = @transform_0, window_bounds = array<i64: 1, 4, 2, 128>}, {transform_indices = @transform_1, window_bounds = array<i64: 1, 1, 2, 128>}, {transform_indices = @transform_2, window_bounds = array<i64: 1, 1, 4, 128>}, {transform_indices = @transform_3, window_bounds = array<i64: 1, 1, 4, 128>}]} {
    %c0 = arith.constant 0 : index
    %c0_0 = arith.constant 0 : index
    %c0_1 = arith.constant 0 : index
    %c0_2 = arith.constant 0 : index
    %0 = vector.load %arg3[%c0, %c0_0, %c0_1, %c0_2] : memref<1x1x2x128xi8, #tpu.memory_space<vmem>>, vector<1x1x2x128xi8>
    %1 = vector.shape_cast %0 : vector<1x1x2x128xi8> to vector<2x128xi8>
    %2 = arith.extsi %1 : vector<2x128xi8> to vector<2x128xi32>
    %c0_3 = arith.constant 0 : index
    %c0_4 = arith.constant 0 : index
    %c0_5 = arith.constant 0 : index
    %c0_6 = arith.constant 0 : index
    %3 = vector.load %arg2[%c0_3, %c0_4, %c0_5, %c0_6] : memref<1x4x2x128xf32, #tpu.memory_space<vmem>>, vector<1x1x2x128xf32>
    %4 = vector.shape_cast %3 : vector<1x1x2x128xf32> to vector<2x128xf32>
    %c0_7 = arith.constant 0 : index
    %c1 = arith.constant 1 : index
    %c0_8 = arith.constant 0 : index
    %c0_9 = arith.constant 0 : index
    %5 = vector.load %arg2[%c0_7, %c1, %c0_8, %c0_9] : memref<1x4x2x128xf32, #tpu.memory_space<vmem>>, vector<1x1x2x128xf32>
    %6 = vector.shape_cast %5 : vector<1x1x2x128xf32> to vector<2x128xf32>
    %c0_10 = arith.constant 0 : index
    %c2 = arith.constant 2 : index
    %c0_11 = arith.constant 0 : index
    %c0_12 = arith.constant 0 : index
    %7 = vector.load %arg2[%c0_10, %c2, %c0_11, %c0_12] : memref<1x4x2x128xf32, #tpu.memory_space<vmem>>, vector<1x1x2x128xf32>
    %8 = vector.shape_cast %7 : vector<1x1x2x128xf32> to vector<2x128xf32>
    %c0_13 = arith.constant 0 : index
    %c3 = arith.constant 3 : index
    %c0_14 = arith.constant 0 : index
    %c0_15 = arith.constant 0 : index
    %9 = vector.load %arg2[%c0_13, %c3, %c0_14, %c0_15] : memref<1x4x2x128xf32, #tpu.memory_space<vmem>>, vector<1x1x2x128xf32>
    %10 = vector.shape_cast %9 : vector<1x1x2x128xf32> to vector<2x128xf32>
    %11 = arith.maximumf %4, %6 : vector<2x128xf32>
    %12 = arith.maximumf %11, %8 : vector<2x128xf32>
    %13 = arith.maximumf %12, %10 : vector<2x128xf32>
    %14 = arith.subf %4, %13 : vector<2x128xf32>
    %15 = math.exp %14 : vector<2x128xf32>
    %16 = arith.subf %6, %13 : vector<2x128xf32>
    %17 = math.exp %16 : vector<2x128xf32>
    %18 = arith.subf %8, %13 : vector<2x128xf32>
    %19 = math.exp %18 : vector<2x128xf32>
    %20 = arith.subf %10, %13 : vector<2x128xf32>
    %21 = math.exp %20 : vector<2x128xf32>
    %22 = arith.addf %15, %17 : vector<2x128xf32>
    %23 = arith.addf %22, %19 : vector<2x128xf32>
    %24 = arith.addf %23, %21 : vector<2x128xf32>
    %25 = tpu.reciprocal %24 {approx = true} : vector<2x128xf32> -> vector<2x128xf32>
    %26 = arith.mulf %15, %25 : vector<2x128xf32>
    %c0_i32 = arith.constant 0 : i32
    %27 = vector.broadcast %c0_i32 : i32 to vector<2x128xi32>
    %28 = arith.cmpi eq, %2, %27 : vector<2x128xi32>
    %cst = arith.constant 0.000000e+00 : f32
    %29 = vector.broadcast %cst : f32 to vector<2x128xf32>
    %30 = arith.select %28, %26, %29 : vector<2x128xi1>, vector<2x128xf32>
    %cst_16 = arith.constant dense<0.000000e+00> : vector<128xf32>
    %31 = vector.multi_reduction <add>, %30, %cst_16 [0] : vector<2x128xf32> to vector<128xf32>
    %32 = vector.shape_cast %31 : vector<128xf32> to vector<1x128xf32>
    %cst_17 = arith.constant 1.000000e+00 : f32
    %33 = vector.broadcast %cst_17 : f32 to vector<2x128xf32>
    %34 = arith.select %28, %33, %26 : vector<2x128xi1>, vector<2x128xf32>
    %cst_18 = arith.constant dense<0.000000e+00> : vector<128xf32>
    %35 = vector.multi_reduction <add>, %34, %cst_18 [0] : vector<2x128xf32> to vector<128xf32>
    %36 = vector.shape_cast %35 : vector<128xf32> to vector<1x128xf32>
    %c0_19 = arith.constant 0 : index
    %c0_20 = arith.constant 0 : index
    %c0_21 = arith.constant 0 : index
    %c0_22 = arith.constant 0 : index
    %37 = vector.load %arg4[%c0_19, %c0_20, %c0_21, %c0_22] : memref<1x1x4x128xf32, #tpu.memory_space<vmem>>, vector<1x1x1x128xf32>
    %38 = vector.shape_cast %37 : vector<1x1x1x128xf32> to vector<1x128xf32>
    %39 = vector.shape_cast %32 : vector<1x128xf32> to vector<1x1x1x128xf32>
    tpu.vector_store %arg4[%c0_19, %c0_20, %c0_21, %c0_22], %39 {strides = array<i32>} : memref<1x1x4x128xf32, #tpu.memory_space<vmem>>, vector<1x1x1x128xf32>,
    %c0_23 = arith.constant 0 : index
    %c0_24 = arith.constant 0 : index
    %c0_25 = arith.constant 0 : index
    %c0_26 = arith.constant 0 : index
    %40 = vector.load %arg5[%c0_23, %c0_24, %c0_25, %c0_26] : memref<1x1x4x128xf32, #tpu.memory_space<vmem>>, vector<1x1x1x128xf32>
    %41 = vector.shape_cast %40 : vector<1x1x1x128xf32> to vector<1x128xf32>
    %42 = vector.shape_cast %36 : vector<1x128xf32> to vector<1x1x1x128xf32>
    tpu.vector_store %arg5[%c0_23, %c0_24, %c0_25, %c0_26], %42 {strides = array<i32>} : memref<1x1x4x128xf32, #tpu.memory_space<vmem>>, vector<1x1x1x128xf32>,
    %43 = arith.mulf %17, %25 : vector<2x128xf32>
    %c1_i32 = arith.constant 1 : i32
    %44 = vector.broadcast %c1_i32 : i32 to vector<2x128xi32>
    %45 = arith.cmpi eq, %2, %44 : vector<2x128xi32>
    %cst_27 = arith.constant 0.000000e+00 : f32
    %46 = vector.broadcast %cst_27 : f32 to vector<2x128xf32>
    %47 = arith.select %45, %43, %46 : vector<2x128xi1>, vector<2x128xf32>
    %cst_28 = arith.constant dense<0.000000e+00> : vector<128xf32>
    %48 = vector.multi_reduction <add>, %47, %cst_28 [0] : vector<2x128xf32> to vector<128xf32>
    %49 = vector.shape_cast %48 : vector<128xf32> to vector<1x128xf32>
    %cst_29 = arith.constant 1.000000e+00 : f32
    %50 = vector.broadcast %cst_29 : f32 to vector<2x128xf32>
    %51 = arith.select %45, %50, %43 : vector<2x128xi1>, vector<2x128xf32>
    %cst_30 = arith.constant dense<0.000000e+00> : vector<128xf32>
    %52 = vector.multi_reduction <add>, %51, %cst_30 [0] : vector<2x128xf32> to vector<128xf32>
    %53 = vector.shape_cast %52 : vector<128xf32> to vector<1x128xf32>
    %c0_31 = arith.constant 0 : index
    %c0_32 = arith.constant 0 : index
    %c1_33 = arith.constant 1 : index
    %c0_34 = arith.constant 0 : index
    %54 = vector.load %arg4[%c0_31, %c0_32, %c1_33, %c0_34] : memref<1x1x4x128xf32, #tpu.memory_space<vmem>>, vector<1x1x1x128xf32>
    %55 = vector.shape_cast %54 : vector<1x1x1x128xf32> to vector<1x128xf32>
    %56 = vector.shape_cast %49 : vector<1x128xf32> to vector<1x1x1x128xf32>
    tpu.vector_store %arg4[%c0_31, %c0_32, %c1_33, %c0_34], %56 {strides = array<i32>} : memref<1x1x4x128xf32, #tpu.memory_space<vmem>>, vector<1x1x1x128xf32>,
    %c0_35 = arith.constant 0 : index
    %c0_36 = arith.constant 0 : index
    %c1_37 = arith.constant 1 : index
    %c0_38 = arith.constant 0 : index
    %57 = vector.load %arg5[%c0_35, %c0_36, %c1_37, %c0_38] : memref<1x1x4x128xf32, #tpu.memory_space<vmem>>, vector<1x1x1x128xf32>
    %58 = vector.shape_cast %57 : vector<1x1x1x128xf32> to vector<1x128xf32>
    %59 = vector.shape_cast %53 : vector<1x128xf32> to vector<1x1x1x128xf32>
    tpu.vector_store %arg5[%c0_35, %c0_36, %c1_37, %c0_38], %59 {strides = array<i32>} : memref<1x1x4x128xf32, #tpu.memory_space<vmem>>, vector<1x1x1x128xf32>,
    %60 = arith.mulf %19, %25 : vector<2x128xf32>
    %c2_i32 = arith.constant 2 : i32
    %61 = vector.broadcast %c2_i32 : i32 to vector<2x128xi32>
    %62 = arith.cmpi eq, %2, %61 : vector<2x128xi32>
    %cst_39 = arith.constant 0.000000e+00 : f32
    %63 = vector.broadcast %cst_39 : f32 to vector<2x128xf32>
    %64 = arith.select %62, %60, %63 : vector<2x128xi1>, vector<2x128xf32>
    %cst_40 = arith.constant dense<0.000000e+00> : vector<128xf32>
    %65 = vector.multi_reduction <add>, %64, %cst_40 [0] : vector<2x128xf32> to vector<128xf32>
    %66 = vector.shape_cast %65 : vector<128xf32> to vector<1x128xf32>
    %cst_41 = arith.constant 1.000000e+00 : f32
    %67 = vector.broadcast %cst_41 : f32 to vector<2x128xf32>
    %68 = arith.select %62, %67, %60 : vector<2x128xi1>, vector<2x128xf32>
    %cst_42 = arith.constant dense<0.000000e+00> : vector<128xf32>
    %69 = vector.multi_reduction <add>, %68, %cst_42 [0] : vector<2x128xf32> to vector<128xf32>
    %70 = vector.shape_cast %69 : vector<128xf32> to vector<1x128xf32>
    %c0_43 = arith.constant 0 : index
    %c0_44 = arith.constant 0 : index
    %c2_45 = arith.constant 2 : index
    %c0_46 = arith.constant 0 : index
    %71 = vector.load %arg4[%c0_43, %c0_44, %c2_45, %c0_46] : memref<1x1x4x128xf32, #tpu.memory_space<vmem>>, vector<1x1x1x128xf32>
    %72 = vector.shape_cast %71 : vector<1x1x1x128xf32> to vector<1x128xf32>
    %73 = vector.shape_cast %66 : vector<1x128xf32> to vector<1x1x1x128xf32>
    tpu.vector_store %arg4[%c0_43, %c0_44, %c2_45, %c0_46], %73 {strides = array<i32>} : memref<1x1x4x128xf32, #tpu.memory_space<vmem>>, vector<1x1x1x128xf32>,
    %c0_47 = arith.constant 0 : index
    %c0_48 = arith.constant 0 : index
    %c2_49 = arith.constant 2 : index
    %c0_50 = arith.constant 0 : index
    %74 = vector.load %arg5[%c0_47, %c0_48, %c2_49, %c0_50] : memref<1x1x4x128xf32, #tpu.memory_space<vmem>>, vector<1x1x1x128xf32>
    %75 = vector.shape_cast %74 : vector<1x1x1x128xf32> to vector<1x128xf32>
    %76 = vector.shape_cast %70 : vector<1x128xf32> to vector<1x1x1x128xf32>
    tpu.vector_store %arg5[%c0_47, %c0_48, %c2_49, %c0_50], %76 {strides = array<i32>} : memref<1x1x4x128xf32, #tpu.memory_space<vmem>>, vector<1x1x1x128xf32>,
    %77 = arith.mulf %21, %25 : vector<2x128xf32>
    %c3_i32 = arith.constant 3 : i32
    %78 = vector.broadcast %c3_i32 : i32 to vector<2x128xi32>
    %79 = arith.cmpi eq, %2, %78 : vector<2x128xi32>
    %cst_51 = arith.constant 0.000000e+00 : f32
    %80 = vector.broadcast %cst_51 : f32 to vector<2x128xf32>
    %81 = arith.select %79, %77, %80 : vector<2x128xi1>, vector<2x128xf32>
    %cst_52 = arith.constant dense<0.000000e+00> : vector<128xf32>
    %82 = vector.multi_reduction <add>, %81, %cst_52 [0] : vector<2x128xf32> to vector<128xf32>
    %83 = vector.shape_cast %82 : vector<128xf32> to vector<1x128xf32>
    %cst_53 = arith.constant 1.000000e+00 : f32
    %84 = vector.broadcast %cst_53 : f32 to vector<2x128xf32>
    %85 = arith.select %79, %84, %77 : vector<2x128xi1>, vector<2x128xf32>
    %cst_54 = arith.constant dense<0.000000e+00> : vector<128xf32>
    %86 = vector.multi_reduction <add>, %85, %cst_54 [0] : vector<2x128xf32> to vector<128xf32>
    %87 = vector.shape_cast %86 : vector<128xf32> to vector<1x128xf32>
    %c0_55 = arith.constant 0 : index
    %c0_56 = arith.constant 0 : index
    %c3_57 = arith.constant 3 : index
    %c0_58 = arith.constant 0 : index
    %88 = vector.load %arg4[%c0_55, %c0_56, %c3_57, %c0_58] : memref<1x1x4x128xf32, #tpu.memory_space<vmem>>, vector<1x1x1x128xf32>
    %89 = vector.shape_cast %88 : vector<1x1x1x128xf32> to vector<1x128xf32>
    %90 = vector.shape_cast %83 : vector<1x128xf32> to vector<1x1x1x128xf32>
    tpu.vector_store %arg4[%c0_55, %c0_56, %c3_57, %c0_58], %90 {strides = array<i32>} : memref<1x1x4x128xf32, #tpu.memory_space<vmem>>, vector<1x1x1x128xf32>,
    %c0_59 = arith.constant 0 : index
    %c0_60 = arith.constant 0 : index
    %c3_61 = arith.constant 3 : index
    %c0_62 = arith.constant 0 : index
    %91 = vector.load %arg5[%c0_59, %c0_60, %c3_61, %c0_62] : memref<1x1x4x128xf32, #tpu.memory_space<vmem>>, vector<1x1x1x128xf32>
    %92 = vector.shape_cast %91 : vector<1x1x1x128xf32> to vector<1x128xf32>
    %93 = vector.shape_cast %87 : vector<1x128xf32> to vector<1x1x1x128xf32>
    tpu.vector_store %arg5[%c0_59, %c0_60, %c3_61, %c0_62], %93 {strides = array<i32>} : memref<1x1x4x128xf32, #tpu.memory_space<vmem>>, vector<1x1x1x128xf32>,
    return
  }
  func.func @transform_0(%arg0: i32, %arg1: i32) -> (i32, i32, i32, i32) {
    %c0_i32 = arith.constant 0 : i32
    %c0_i32_0 = arith.constant 0 : i32
    %c0_i32_1 = arith.constant 0 : i32
    return %arg0, %c0_i32, %arg1, %c0_i32_0 : i32, i32, i32, i32
  }
  func.func @transform_1(%arg0: i32, %arg1: i32) -> (i32, i32, i32, i32) {
    %c0_i32 = arith.constant 0 : i32
    %c0_i32_0 = arith.constant 0 : i32
    %c0_i32_1 = arith.constant 0 : i32
    return %arg0, %c0_i32, %arg1, %c0_i32_0 : i32, i32, i32, i32
  }
  func.func @transform_2(%arg0: i32, %arg1: i32) -> (i32, i32, i32, i32) {
    %c0_i32 = arith.constant 0 : i32
    %c0_i32_0 = arith.constant 0 : i32
    %c0_i32_1 = arith.constant 0 : i32
    return %arg0, %arg1, %c0_i32, %c0_i32_0 : i32, i32, i32, i32
  }
  func.func @transform_3(%arg0: i32, %arg1: i32) -> (i32, i32, i32, i32) {
    %c0_i32 = arith.constant 0 : i32
    %c0_i32_0 = arith.constant 0 : i32
    %c0_i32_1 = arith.constant 0 : i32
    return %arg0, %arg1, %c0_i32, %c0_i32_0 : i32, i32, i32, i32
  }
}

</mosaic_0001>

<llo_original>
// kernel: tpu_custom_call.1
$region0: #{tpu_custom_call.1}
  #allocation0 [shape = 'u32[]', space=smem, size = 0x4, offset = 0x4, fixed_abs, tag = 'smem constant byte address 0x4 - core index']
  #allocation1 [shape = 'u32[144,128]{1,0:T(1,128)}', space=vmem, size = 0x12000, scoped, tag = 'internal scratch']
  %s0 = inlined_call_operand.hbm [shape: f32[2,4,2,128], index: 0, kind: input, shape index: {}]
  %s1 = inlined_call_operand.hbm [shape: s8[2,1,2,128], index: 1, kind: input, shape index: {}]
  %s2 = inlined_call_operand.hbm [shape: f32[2,1,4,128], index: 2, kind: output, shape index: {0}]
  %s3 = inlined_call_operand.hbm [shape: f32[2,1,4,128], index: 3, kind: output, shape index: {1}]
  %4 = xla_tuple %s2, %s3
  %s5 = sld [smem:[#allocation0]]
  $region57: #{tpu_custom_call.1} parent=0
    _
  %s7 = ssub.s32 1, %s5
  %s8 = scalar_select 0, %s7, %s5
  $region1: #{tpu_custom_call.1} parent=0
    #allocation2 [shape = 'u8[8192]{0}', space=vmem, size = 0x2000, scoped, tag = 'input window, operand 0']
    #allocation3 [shape = 's32[2]{0}', space=sflag, size = 0x8, scoped, tag = 'scoped memory for tpu_custom_call.1']
    #allocation4 [shape = 's32[2]{0}', space=sflag, size = 0x8, scoped, tag = 'scoped memory for tpu_custom_call.1']
    #allocation5 [shape = 'u8[1024]{0}', space=vmem, size = 0x400, scoped, tag = 'input window, operand 1']
    #allocation6 [shape = 's32[2]{0}', space=sflag, size = 0x8, scoped, tag = 'scoped memory for tpu_custom_call.1']
    #allocation7 [shape = 'u8[4096]{0}', space=vmem, size = 0x1000, scoped, tag = 'output window, operand 0']
    #allocation8 [shape = 'u8[4096]{0}', space=vmem, size = 0x1000, scoped, tag = 'output window, operand 1']
    #allocation9 [shape = 's32[2]{0}', space=sflag, size = 0x8, scoped, tag = 'scoped memory for tpu_custom_call.1']
    %9 = vsyncpa [#allocation3], 0
    %s10 = scalar_lea.sflag [#allocation3], 1
    %11 = vsyncpa %s10, 0
    %12 = vsyncpa [#allocation6], 0
    %s13 = scalar_lea.sflag [#allocation6], 1
    %14 = vsyncpa %s13, 0
    %15 = vsyncpa [#allocation4], 0
    %s16 = scalar_lea.sflag [#allocation4], 1
    %17 = vsyncpa %s16, 0
    %18 = vsyncpa [#allocation9], 0
    %s19 = scalar_lea.sflag [#allocation9], 1
    %20 = vsyncpa %s19, 0
    loop: start=0, step=1, limit=4
    $region2: #{tpu_custom_call.1} parent=1 // loop_pre_header
      _
    $region3: #{tpu_custom_call.1} parent=1 // loop_header
      %s22 = sphi 0, %s26
      %p23 = scmp.ge.s32.totalorder %s22, 4
      %s29 = sphi 0, %s41
      %s30 = sphi 0, %s37
      %s31 = sphi 0, %s29
      %s32 = sphi 0, %s30
      %s33 = sphi 0, %s31
      %s34 = sphi 0, %s32
      %s46 = sphi 0, %s48
      %s49 = sphi 0, %s46
      %s50 = sphi 0, %s49
      %s66 = sphi 0, %s50
      %s74 = sphi 0, %s76
      %s77 = sphi 0, %s74
      %s78 = sphi 0, %s77
      %s94 = sphi 0, %s78
      %s102 = sphi 0, %s104
      %s105 = sphi 0, %s102
      %s106 = sphi 0, %s105
      %s122 = sphi 0, %s106
      %s130 = sphi 0, %s132
      %s133 = sphi 0, %s130
      %s134 = sphi 0, %s133
      %s150 = sphi 0, %s134
    $region4: #{tpu_custom_call.1} parent=1 // loop_header_branch
      %25 = sbr.rel (%p23) target = $region8
    $region5: #{tpu_custom_call.1} parent=1 // loop_body
      %s27 = ssub.s32 %s22, 1
      %s28 = ssub.s32 %s22, 2
      %s35 = sadd.s32 1, %s30
      %p36 = scmp.ge.s32.totalorder %s35, 1
      %s37 = scalar_select %p36, 0, %s35
      %s38 = sadd.s32 1, %s29
      %s39 = scalar_select %p36, %s38, %s29
      %p40 = scmp.ge.s32.totalorder %s39, 2
      %s41 = scalar_select %p40, 0, %s39
      %s42 = ssub.s32 %s29, %s41
      %s43 = ssub.s32 %s30, %s37
      %s44 = sor.u32 %s42, %s43
      %p45 = scmp.eq.s32.totalorder %s44, 0
      %s47 = sadd.s32 %s46, 1
      %s48 = scalar_select %p45, %s46, %s47
      %p51 = pneg %p45
      %p52 = scmp.eq.s32.totalorder %s22, 1
      %p53 = por %p51, %p52
      %p54 = scmp.ne.s32.totalorder %s46, %s49
      %p55 = scmp.eq.s32.totalorder %s22, 0
      %p56 = por %p54, %p55
      %p57 = scmp.ne.s32.totalorder %s46, %s49
      %p58 = scmp.eq.s32.totalorder %s27, 1
      %p59 = por %p57, %p58
      %p60 = scmp.ne.s32.totalorder %s49, %s50
      %p61 = scmp.eq.s32.totalorder %s27, 0
      %p62 = por %p60, %p61
      %p63 = scmp.ne.s32.totalorder %s49, %s50
      %p64 = scmp.eq.s32.totalorder %s28, 1
      %p65 = por %p63, %p64
      %p67 = scmp.ne.s32.totalorder %s50, %s66
      %p68 = scmp.eq.s32.totalorder %s28, 0
      %p69 = por %p67, %p68
      %s70 = ssub.s32 %s29, %s41
      %s71 = ssub.s32 %s30, %s37
      %s72 = sor.u32 %s70, %s71
      %p73 = scmp.eq.s32.totalorder %s72, 0
      %s75 = sadd.s32 %s74, 1
      %s76 = scalar_select %p73, %s74, %s75
      %p79 = pneg %p73
      %p80 = scmp.eq.s32.totalorder %s22, 1
      %p81 = por %p79, %p80
      %p82 = scmp.ne.s32.totalorder %s74, %s77
      %p83 = scmp.eq.s32.totalorder %s22, 0
      %p84 = por %p82, %p83
      %p85 = scmp.ne.s32.totalorder %s74, %s77
      %p86 = scmp.eq.s32.totalorder %s27, 1
      %p87 = por %p85, %p86
      %p88 = scmp.ne.s32.totalorder %s77, %s78
      %p89 = scmp.eq.s32.totalorder %s27, 0
      %p90 = por %p88, %p89
      %p91 = scmp.ne.s32.totalorder %s77, %s78
      %p92 = scmp.eq.s32.totalorder %s28, 1
      %p93 = por %p91, %p92
      %p95 = scmp.ne.s32.totalorder %s78, %s94
      %p96 = scmp.eq.s32.totalorder %s28, 0
      %p97 = por %p95, %p96
      %s98 = ssub.s32 %s29, %s41
      %s99 = ssub.s32 %s30, %s37
      %s100 = sor.u32 %s98, %s99
      %p101 = scmp.eq.s32.totalorder %s100, 0
      %s103 = sadd.s32 %s102, 1
      %s104 = scalar_select %p101, %s102, %s103
      %p107 = pneg %p101
      %p108 = scmp.eq.s32.totalorder %s22, 1
      %p109 = por %p107, %p108
      %p110 = scmp.ne.s32.totalorder %s102, %s105
      %p111 = scmp.eq.s32.totalorder %s22, 0
      %p112 = por %p110, %p111
      %p113 = scmp.ne.s32.totalorder %s102, %s105
      %p114 = scmp.eq.s32.totalorder %s27, 1
      %p115 = por %p113, %p114
      %p116 = scmp.ne.s32.totalorder %s105, %s106
      %p117 = scmp.eq.s32.totalorder %s27, 0
      %p118 = por %p116, %p117
      %p119 = scmp.ne.s32.totalorder %s105, %s106
      %p120 = scmp.eq.s32.totalorder %s28, 1
      %p121 = por %p119, %p120
      %p123 = scmp.ne.s32.totalorder %s106, %s122
      %p124 = scmp.eq.s32.totalorder %s28, 0
      %p125 = por %p123, %p124
      %s126 = ssub.s32 %s29, %s41
      %s127 = ssub.s32 %s30, %s37
      %s128 = sor.u32 %s126, %s127
      %p129 = scmp.eq.s32.totalorder %s128, 0
      %s131 = sadd.s32 %s130, 1
      %s132 = scalar_select %p129, %s130, %s131
      %p135 = pneg %p129
      %p136 = scmp.eq.s32.totalorder %s22, 1
      %p137 = por %p135, %p136
      %p138 = scmp.ne.s32.totalorder %s130, %s133
      %p139 = scmp.eq.s32.totalorder %s22, 0
      %p140 = por %p138, %p139
      %p141 = scmp.ne.s32.totalorder %s130, %s133
      %p142 = scmp.eq.s32.totalorder %s27, 1
      %p143 = por %p141, %p142
      %p144 = scmp.ne.s32.totalorder %s133, %s134
      %p145 = scmp.eq.s32.totalorder %s27, 0
      %p146 = por %p144, %p145
      %p147 = scmp.ne.s32.totalorder %s133, %s134
      %p148 = scmp.eq.s32.totalorder %s28, 1
      %p149 = por %p147, %p148
      %p151 = scmp.ne.s32.totalorder %s134, %s150
      %p152 = scmp.eq.s32.totalorder %s28, 0
      %p153 = por %p151, %p152
      %p154 = scmp.le.s32.totalorder 1, %s22
      %p155 = scmp.lt.s32.totalorder %s22, 3
      %p156 = pnand %p154, %p155
      %p157 = pneg %p156
      // Predicated region
      $region9: #{tpu_custom_call.1} parent=5 // pred_check
        _
      $region10: #{tpu_custom_call.1} parent=5 // pred_check_branch
        %159 = sbr.rel (%p156) target = $region12
      $region11: #{tpu_custom_call.1} parent=5 // pred_region
        %s160 = ssub.s32 %s22, 1
      $region12: #{tpu_custom_call.1} parent=5 // pred_fallthru
        _
      %p161 = scmp.lt.s32.totalorder %s22, 2
      // Predicated region
      $region13: #{tpu_custom_call.1} parent=5 // pred_check
        %p162 = pneg %p161
      $region14: #{tpu_custom_call.1} parent=5 // pred_check_branch
        %164 = sbr.rel (%p162) target = $region16
      $region15: #{tpu_custom_call.1} parent=5 // pred_region
        // Predicated region
        $region17: #{tpu_custom_call.1} parent=15 // pred_check
          %p165 = pneg %p56
        $region18: #{tpu_custom_call.1} parent=15 // pred_check_branch
          %167 = sbr.rel (%p165) target = $region20
        $region19: #{tpu_custom_call.1} parent=15 // pred_region
          %s168 = sand.u32 %s46, 1
          %s169 = scalar_lea.sflag [#allocation3], %s168
          %s170 = sand.u32 %s46, 1
          %s171 = smul.addr %s170, 8
          %s172 = scalar_lea.vmem [#allocation2], %s171
          %s174 = ssub.s32 128, 128
          %175 = vsyncadd %s169, %s174
          %s176 = smul.addr %s29, 4
          %s177 = sadd.s32 %s30, %s176
          %s178 = smul.addr %s177, 32
          %s179 = scalar_lea.hbm %s0, %s178
          %s180 = sshll.u32 %s172, 4
          %s181 = int_to_ptr.vmem [resolvable:$true] %s180
          %186 = dma.hbm_to_vmem [thread:$0]  %s179, 128, %s181, %s169, 32, 32, 2
        $region20: #{tpu_custom_call.1} parent=15 // pred_fallthru
          _
        // Predicated region
        $region21: #{tpu_custom_call.1} parent=15 // pred_check
          %p187 = pneg %p84
        $region22: #{tpu_custom_call.1} parent=15 // pred_check_branch
          %189 = sbr.rel (%p187) target = $region24
        $region23: #{tpu_custom_call.1} parent=15 // pred_region
          %s190 = sand.u32 %s74, 1
          %s191 = scalar_lea.sflag [#allocation6], %s190
          %s192 = sand.u32 %s74, 1
          %s193 = scalar_lea.vmem [#allocation5], %s192
          %s195 = ssub.s32 16, 16
          %196 = vsyncadd %s191, %s195
          %s197 = sadd.s32 %s30, %s29
          %s198 = smul.addr %s197, 16
          %s199 = scalar_lea.hbm %s1, %s198
          %s201 = sshll.u32 %s193, 4
          %s202 = int_to_ptr.vmem [resolvable:$true] %s201
          %204 = dma.hbm_to_vmem [thread:$0]  %s199, 16, %s202, %s191
        $region24: #{tpu_custom_call.1} parent=15 // pred_fallthru
          _
      $region16: #{tpu_custom_call.1} parent=5 // pred_fallthru
        _
      %p205 = scmp.le.s32.totalorder 1, %s22
      %p206 = scmp.lt.s32.totalorder %s22, 3
      %p207 = pnand %p205, %p206
      %p208 = pneg %p207
      // Predicated region
      $region25: #{tpu_custom_call.1} parent=5 // pred_check
        _
      $region26: #{tpu_custom_call.1} parent=5 // pred_check_branch
        %210 = sbr.rel (%p207) target = $region28
      $region27: #{tpu_custom_call.1} parent=5 // pred_region
        %s211 = ssub.s32 %s22, 1
        %s212 = sand.u32 %s49, 1
        %s213 = scalar_lea.sflag [#allocation3], %s212
        %s214 = sand.u32 %s49, 1
        %s215 = smul.addr %s214, 8
        %s216 = scalar_lea.vmem [#allocation2], %s215
        // Predicated region
        $region29: #{tpu_custom_call.1} parent=27 // pred_check
          %p217 = pneg %p62
        $region30: #{tpu_custom_call.1} parent=27 // pred_check_branch
          %219 = sbr.rel (%p217) target = $region32
        $region31: #{tpu_custom_call.1} parent=27 // pred_region
          %220 = dma.done %s213, 128
        $region32: #{tpu_custom_call.1} parent=27 // pred_fallthru
          _
        %s221 = sand.u32 %s77, 1
        %s222 = scalar_lea.sflag [#allocation6], %s221
        %s223 = sand.u32 %s77, 1
        %s224 = scalar_lea.vmem [#allocation5], %s223
        // Predicated region
        $region33: #{tpu_custom_call.1} parent=27 // pred_check
          %p225 = pneg %p90
        $region34: #{tpu_custom_call.1} parent=27 // pred_check_branch
          %227 = sbr.rel (%p225) target = $region36
        $region35: #{tpu_custom_call.1} parent=27 // pred_region
          %228 = dma.done %s222, 16
        $region36: #{tpu_custom_call.1} parent=27 // pred_fallthru
          _
        %s229 = sand.u32 %s49, 1
        %s230 = scalar_lea.sflag [#allocation3], %s229
        %s231 = sand.u32 %s49, 1
        %s232 = smul.addr %s231, 8
        %s233 = scalar_lea.vmem [#allocation2], %s232
        %p234 = pneg %p62
        %p235 = pneg %p59
        %s236 = sand.u32 %s77, 1
        %s237 = scalar_lea.sflag [#allocation6], %s236
        %s238 = sand.u32 %s77, 1
        %s239 = scalar_lea.vmem [#allocation5], %s238
        %p240 = pneg %p90
        %p241 = pneg %p87
        %p242 = pneg %p118
        %p243 = pneg %p115
        %s244 = sand.u32 %s105, 1
        %s245 = scalar_lea.sflag [#allocation4], %s244
        %s246 = sand.u32 %s105, 1
        %s247 = smul.addr %s246, 4
        %s248 = scalar_lea.vmem [#allocation7], %s247
        %p249 = pneg %p146
        %p250 = pneg %p143
        %s251 = sand.u32 %s133, 1
        %s252 = scalar_lea.sflag [#allocation9], %s251
        %s253 = sand.u32 %s133, 1
        %s254 = smul.addr %s253, 4
        %s255 = scalar_lea.vmem [#allocation8], %s254
        %v256 = vld [vmem:[%s224] sm:$0x1]
        %v257 = vunpack.c.0.s8 %v256
        %v258 = vld [vmem:[%s216] sm:$0x3]
        %s259 = scalar_lea.vmem %s216, 2 [#allocation2]
        %v260 = vld [vmem:[%s259] sm:$0x3]
        %s261 = scalar_lea.vmem %s216, 4 [#allocation2]
        %v262 = vld [vmem:[%s261] sm:$0x3]
        %s263 = scalar_lea.vmem %s216, 6 [#allocation2]
        %v264 = vld [vmem:[%s263] sm:$0x3]
        %v265 = vmax.f32 %v258, %v260
        %v266 = vmax.f32 %v265, %v262
        %v267 = vmax.f32 %v266, %v264
        %v268 = vsub.f32 %v258, %v267
        %v269 = vmul.f32 %v268, 1.442695
        %v270 = vpow.pop %v269
        %v271 = vsub.f32 %v260, %v267
        %v272 = vmul.f32 %v271, 1.442695
        %v273 = vpow.pop %v272
        %v274 = vsub.f32 %v262, %v267
        %v275 = vmul.f32 %v274, 1.442695
        %v276 = vpow.pop %v275
        %v277 = vsub.f32 %v264, %v267
        %v278 = vmul.f32 %v277, 1.442695
        %v279 = vpow.pop %v278
        %v280 = vadd.f32 %v270, %v273
        %v281 = vadd.f32 %v280, %v276
        %v282 = vadd.f32 %v281, %v279
        %v283 = vrcp.pop %v282
        %v284 = vmul.f32 %v270, %v283
        %vm285 = vcmp.eq.s32.totalorder %v257, 0
        %v286 = vsel %vm285, %v284, 0.0
        %vm287 = vcmask 1041408
        %v288 = vsel %vm287, %v286, 0.0
        %v289 = vrot.slane %v288, 4
        %v290 = vadd.f32 %v288, %v289
        %v291 = vrot.slane %v290, 2
        %v292 = vadd.f32 %v290, %v291
        %v293 = vrot.slane %v292, 1
        %v294 = vadd.f32 %v292, %v293
        %v295 = vsel %vm285, 1.0, %v284
        %v296 = vsel %vm287, %v295, 0.0
        %v297 = vrot.slane %v296, 4
        %v298 = vadd.f32 %v296, %v297
        %v299 = vrot.slane %v298, 2
        %v300 = vadd.f32 %v298, %v299
        %v301 = vrot.slane %v300, 1
        %v302 = vadd.f32 %v300, %v301
        %303 = vst [vmem:[%s248] sm:$0x1] %v294
        %304 = vst [vmem:[%s255] sm:$0x1] %v302
        %v305 = vmul.f32 %v273, %v283
        %vm306 = vcmp.eq.s32.totalorder %v257, 1
        %v307 = vsel %vm306, %v305, 0.0
        %v308 = vsel %vm287, %v307, 0.0
        %v309 = vrot.slane %v308, 4
        %v310 = vadd.f32 %v308, %v309
        %v311 = vrot.slane %v310, 2
        %v312 = vadd.f32 %v310, %v311
        %v313 = vrot.slane %v312, 1
        %v314 = vadd.f32 %v312, %v313
        %v315 = vsel %vm306, 1.0, %v305
        %v316 = vsel %vm287, %v315, 0.0
        %v317 = vrot.slane %v316, 4
        %v318 = vadd.f32 %v316, %v317
        %v319 = vrot.slane %v318, 2
        %v320 = vadd.f32 %v318, %v319
        %v321 = vrot.slane %v320, 1
        %v322 = vadd.f32 %v320, %v321
        %323 = vst [vmem:[%s248 + $0x1] sm:$0x1] %v314
        %324 = vst [vmem:[%s255 + $0x1] sm:$0x1] %v322
        %v325 = vmul.f32 %v276, %v283
        %vm326 = vcmp.eq.s32.totalorder %v257, 2
        %v327 = vsel %vm326, %v325, 0.0
        %v328 = vsel %vm287, %v327, 0.0
        %v329 = vrot.slane %v328, 4
        %v330 = vadd.f32 %v328, %v329
        %v331 = vrot.slane %v330, 2
        %v332 = vadd.f32 %v330, %v331
        %v333 = vrot.slane %v332, 1
        %v334 = vadd.f32 %v332, %v333
        %v335 = vsel %vm326, 1.0, %v325
        %v336 = vsel %vm287, %v335, 0.0
        %v337 = vrot.slane %v336, 4
        %v338 = vadd.f32 %v336, %v337
        %v339 = vrot.slane %v338, 2
        %v340 = vadd.f32 %v338, %v339
        %v341 = vrot.slane %v340, 1
        %v342 = vadd.f32 %v340, %v341
        %343 = vst [vmem:[%s248 + $0x2] sm:$0x1] %v334
        %344 = vst [vmem:[%s255 + $0x2] sm:$0x1] %v342
        %v345 = vmul.f32 %v279, %v283
        %vm346 = vcmp.eq.s32.totalorder %v257, 3
        %v347 = vsel %vm346, %v345, 0.0
        %v348 = vsel %vm287, %v347, 0.0
        %v349 = vrot.slane %v348, 4
        %v350 = vadd.f32 %v348, %v349
        %v351 = vrot.slane %v350, 2
        %v352 = vadd.f32 %v350, %v351
        %v353 = vrot.slane %v352, 1
        %v354 = vadd.f32 %v352, %v353
        %v355 = vsel %vm346, 1.0, %v345
        %v356 = vsel %vm287, %v355, 0.0
        %v357 = vrot.slane %v356, 4
        %v358 = vadd.f32 %v356, %v357
        %v359 = vrot.slane %v358, 2
        %v360 = vadd.f32 %v358, %v359
        %v361 = vrot.slane %v360, 1
        %v362 = vadd.f32 %v360, %v361
        %363 = vst [vmem:[%s248 + $0x3] sm:$0x1] %v354
        %364 = vst [vmem:[%s255 + $0x3] sm:$0x1] %v362
        %s365 = sand.u32 %s105, 1
        %s366 = scalar_lea.sflag [#allocation4], %s365
        %s367 = sand.u32 %s105, 1
        %s368 = smul.addr %s367, 4
        %s369 = scalar_lea.vmem [#allocation7], %s368
        %s370 = sand.u32 %s133, 1
        %s371 = scalar_lea.sflag [#allocation9], %s370
        %s372 = sand.u32 %s133, 1
        %s373 = smul.addr %s372, 4
        %s374 = scalar_lea.vmem [#allocation8], %s373
        // Predicated region
        $region37: #{tpu_custom_call.1} parent=27 // pred_check
          %p375 = pneg %p115
        $region38: #{tpu_custom_call.1} parent=27 // pred_check_branch
          %377 = sbr.rel (%p375) target = $region40
        $region39: #{tpu_custom_call.1} parent=27 // pred_region
          %s379 = ssub.s32 64, 64
          %380 = vsyncadd %s366, %s379
          %s381 = sadd.s32 %s32, %s31
          %s382 = smul.addr %s381, 64
          %s383 = scalar_lea.hbm %s2, %s382
          %s385 = sshll.u32 %s369, 4
          %s386 = int_to_ptr.vmem [resolvable:$true] %s385
          %388 = dma.vmem_to_hbm [thread:$0]  %s386, 64, %s383, %s366
        $region40: #{tpu_custom_call.1} parent=27 // pred_fallthru
          _
        // Predicated region
        $region41: #{tpu_custom_call.1} parent=27 // pred_check
          %p389 = pneg %p143
        $region42: #{tpu_custom_call.1} parent=27 // pred_check_branch
          %391 = sbr.rel (%p389) target = $region44
        $region43: #{tpu_custom_call.1} parent=27 // pred_region
          %s393 = ssub.s32 64, 64
          %394 = vsyncadd %s371, %s393
          %s395 = sadd.s32 %s32, %s31
          %s396 = smul.addr %s395, 64
          %s397 = scalar_lea.hbm %s3, %s396
          %s399 = sshll.u32 %s374, 4
          %s400 = int_to_ptr.vmem [resolvable:$true] %s399
          %402 = dma.vmem_to_hbm [thread:$0]  %s400, 64, %s397, %s371
        $region44: #{tpu_custom_call.1} parent=27 // pred_fallthru
          _
      $region28: #{tpu_custom_call.1} parent=5 // pred_fallthru
        _
      %p403 = scmp.le.s32.totalorder 2, %s22
      // Predicated region
      $region45: #{tpu_custom_call.1} parent=5 // pred_check
        %p404 = pneg %p403
      $region46: #{tpu_custom_call.1} parent=5 // pred_check_branch
        %406 = sbr.rel (%p404) target = $region48
      $region47: #{tpu_custom_call.1} parent=5 // pred_region
        %s407 = ssub.s32 %s22, 2
        // Predicated region
        $region49: #{tpu_custom_call.1} parent=47 // pred_check
          %p408 = pneg %p121
        $region50: #{tpu_custom_call.1} parent=47 // pred_check_branch
          %410 = sbr.rel (%p408) target = $region52
        $region51: #{tpu_custom_call.1} parent=47 // pred_region
          %s411 = sand.u32 %s106, 1
          %s412 = scalar_lea.sflag [#allocation4], %s411
          %s413 = sand.u32 %s106, 1
          %s414 = smul.addr %s413, 4
          %s415 = scalar_lea.vmem [#allocation7], %s414
          %416 = dma.done %s412, 64
        $region52: #{tpu_custom_call.1} parent=47 // pred_fallthru
          _
        // Predicated region
        $region53: #{tpu_custom_call.1} parent=47 // pred_check
          %p417 = pneg %p149
        $region54: #{tpu_custom_call.1} parent=47 // pred_check_branch
          %419 = sbr.rel (%p417) target = $region56
        $region55: #{tpu_custom_call.1} parent=47 // pred_region
          %s420 = sand.u32 %s134, 1
          %s421 = scalar_lea.sflag [#allocation9], %s420
          %s422 = sand.u32 %s134, 1
          %s423 = smul.addr %s422, 4
          %s424 = scalar_lea.vmem [#allocation8], %s423
          %425 = dma.done %s421, 64
        $region56: #{tpu_custom_call.1} parent=47 // pred_fallthru
          _
      $region48: #{tpu_custom_call.1} parent=5 // pred_fallthru
        _
    $region6: #{tpu_custom_call.1} parent=1 // loop_footer
      %s26 = sadd.s32 1, %s22
    $region7: #{tpu_custom_call.1} parent=1 // loop_footer_branch
      %21 = sbr.rel target = $region3
    $region8: #{tpu_custom_call.1} parent=1 // loop_exit
      _
    %426 = vsyncpa [#allocation3], 1
    %s427 = scalar_lea.sflag [#allocation3], 1
    %428 = vsyncpa %s427, 1
    %429 = vsyncpa [#allocation6], 1
    %s430 = scalar_lea.sflag [#allocation6], 1
    %431 = vsyncpa %s430, 1
    %432 = vsyncpa [#allocation4], 1
    %s433 = scalar_lea.sflag [#allocation4], 1
    %434 = vsyncpa %s433, 1
    %435 = vsyncpa [#allocation9], 1
    %s436 = scalar_lea.sflag [#allocation9], 1
    %437 = vsyncpa %s436, 1

</llo_original>
